<compile_context>
chip_gen: v5e
topology: v5e:2x2
jax: 0.10.0
libtpu: 0.0.40
codegen_flags: <defaults>
</compile_context>

<pallas_src>
import functools

import jax
import jax.numpy as jnp
from jax.experimental import pallas as pl
from jax.experimental.pallas import tpu as pltpu


def _round_up(x, m):
    return (x + m - 1) // m * m


def _mlp_logsoftmax_kernel(x_ref, w1_ref, b1_ref, w2_ref, b2_ref, o_ref):
    # Cast the f32 activation tile to bf16 for the MXU; accumulate in f32.
    x = x_ref[...].astype(w1_ref.dtype)
    h = jnp.dot(x, w1_ref[...], preferred_element_type=jnp.float32)
    h = jnp.maximum(h + b1_ref[...], 0.0)                  # bias + ReLU in f32
    logits = jnp.dot(h.astype(w2_ref.dtype), w2_ref[...],
                     preferred_element_type=jnp.float32)
    # b2 was padded with -1e30, so the bias add also masks padded columns.
    logits = logits + b2_ref[...]
    # Numerically stable log_softmax along the feature (lane) axis.
    m = jnp.max(logits, axis=-1, keepdims=True)
    shifted = logits - m
    lse = jnp.log(jnp.sum(jnp.exp(shifted), axis=-1, keepdims=True))
    o_ref[...] = (shifted - lse).astype(o_ref.dtype)


def log_softmax_model(x, w1, b1, w2, b2, *, tile_b_max=2048, mxu_dtype=jnp.bfloat16):
    """x: (B, 400) f32; w1: (200, 400); b1: (200,); w2: (10, 200); b2: (10,)
    in PyTorch nn.Linear layout. Returns (B, 10) f32 log-probabilities."""
    B, d_in = x.shape
    d_hid = w1.shape[0]
    d_out = w2.shape[0]

    # Only the lane (last) dims of matmul outputs need 128-alignment.
    d_hid_p = _round_up(d_hid, 128)   # 200 -> 256
    d_out_p = _round_up(d_out, 128)   # 10  -> 128 (lane-dense output slab)

    # Batch tiling: derive the step count from B so batch padding is at most one
    # 16-row group; force >=2 steps when feasible so v7x's two cores both work.
    tile_b_max = max(16, tile_b_max)
    n_steps = pl.cdiv(B, min(tile_b_max, _round_up(B, 16)))
    if B >= 32:
        n_steps = max(n_steps, 2)
    tile_b = _round_up(pl.cdiv(B, n_steps), 16)   # 16-row granularity for bf16 MXU tiles
    b_p = n_steps * tile_b

    # x stays f32 at its real feature width (400 == full array dim -> legal block).
    x_p = x if b_p == B else jnp.pad(x, ((0, b_p - B), (0, 0)))
    # Weights in bf16 for the MXU; zero padding is exact through matmul + ReLU.
    w1_t = jnp.pad(w1.T, ((0, 0), (0, d_hid_p - d_hid))).astype(mxu_dtype)
    w2_t = jnp.pad(w2.T, ((0, d_hid_p - d_hid), (0, d_out_p - d_out))).astype(mxu_dtype)
    b1_p = jnp.pad(b1, (0, d_hid_p - d_hid)).reshape(1, d_hid_p).astype(jnp.float32)
    # Bake the padded-column mask into the bias: padded logits become -1e30.
    b2_p = jnp.pad(b2.astype(jnp.float32), (0, d_out_p - d_out),
                   constant_values=-1e30).reshape(1, d_out_p)

    cost = pl.CostEstimate(
        flops=2 * b_p * (d_in * d_hid_p + d_hid_p * d_out_p),
        transcendentals=b_p * d_out_p,
        bytes_accessed=(x_p.size * 4                       # f32 x reads
                        + (w1_t.size + w2_t.size) * 2      # bf16 weights (once)
                        + (b1_p.size + b2_p.size) * 4      # f32 biases (once)
                        + b_p * d_out_p * 4),              # f32 output slab
    )

    out_p = pl.pallas_call(
        _mlp_logsoftmax_kernel,
        out_shape=jax.ShapeDtypeStruct((b_p, d_out_p), jnp.float32),
        grid_spec=pltpu.PrefetchScalarGridSpec(
            num_scalar_prefetch=0,
            grid=(n_steps,),
            in_specs=[
                pl.BlockSpec((tile_b, d_in), lambda i: (i, 0)),      # x: tiled over batch, f32
                pl.BlockSpec((d_in, d_hid_p), lambda i: (0, 0)),     # w1: VMEM-resident
                pl.BlockSpec((1, d_hid_p), lambda i: (0, 0)),        # b1: VMEM-resident
                pl.BlockSpec((d_hid_p, d_out_p), lambda i: (0, 0)),  # w2: VMEM-resident
                pl.BlockSpec((1, d_out_p), lambda i: (0, 0)),        # b2: VMEM-resident
            ],
            out_specs=pl.BlockSpec((tile_b, d_out_p), lambda i: (i, 0)),
        ),
        compiler_params=pltpu.CompilerParams(
            dimension_semantics=("parallel",),
            vmem_limit_bytes=32 * 1024 * 1024,   # fits v7x's 64 MiB/TC with headroom
        ),
        cost_estimate=cost,
    )(x_p, w1_t, b1_p, w2_t, b2_p)

    # TODO(synk): downstream consumers could read the lane-dense (b_p, 128) slab
    # directly to avoid this wrapper slice re-reading the output.
    return out_p[:B, :d_out]


def reference(x, w1, b1, w2, b2, mxu_dtype=jnp.bfloat16):
    # Same numerics as the kernel: bf16 MXU inputs, f32 accumulation/elementwise.
    h = jnp.dot(x.astype(mxu_dtype), w1.T.astype(mxu_dtype),
                preferred_element_type=jnp.float32) + b1
    h = jnp.maximum(h, 0.0)
    logits = jnp.dot(h.astype(mxu_dtype), w2.T.astype(mxu_dtype),
                     preferred_element_type=jnp.float32) + b2
    return jax.nn.log_softmax(logits, axis=1)


if __name__ == "__main__":
    key = jax.random.PRNGKey(0)
    k_x, k_w1, k_b1, k_w2, k_b2 = jax.random.split(key, 5)

    B, D_IN, D_HID, D_OUT = 8, 400, 200, 10

    x = jax.random.normal(k_x, (B, D_IN), dtype=jnp.float32)

    # PyTorch-like init: uniform(-1/sqrt(fan_in), 1/sqrt(fan_in)), (out, in) layout.
    bound1 = 1.0 / (D_IN ** 0.5)
    w1 = jax.random.uniform(k_w1, (D_HID, D_IN), jnp.float32, -bound1, bound1)
    b1 = jax.random.uniform(k_b1, (D_HID,), jnp.float32, -bound1, bound1)
    bound2 = 1.0 / (D_HID ** 0.5)
    w2 = jax.random.uniform(k_w2, (D_OUT, D_HID), jnp.float32, -bound2, bound2)
    b2 = jax.random.uniform(k_b2, (D_OUT,), jnp.float32, -bound2, bound2)

    out = log_softmax_model(x, w1, b1, w2, b2)
    out = jax.block_until_ready(out)

    ref = reference(x, w1, b1, w2, b2)
    assert out.shape == (B, D_OUT)
    # bf16 MXU inputs (matched in the reference); tolerance reflects bf16 quantization.
    assert jnp.allclose(out, ref, atol=2e-3, rtol=2e-3), "mismatch vs JAX reference"

    print("KERNEL_OK")
</pallas_src>

<mosaic_0001>
module attributes {stable_mosaic.version = 11 : i64} {
  func.func @_mlp_logsoftmax_kernel(%arg0: i32, %arg1: memref<16x400xf32, #tpu.memory_space<vmem>>, %arg2: memref<400x256xbf16, #tpu.memory_space<vmem>>, %arg3: memref<1x256xf32, #tpu.memory_space<vmem>>, %arg4: memref<256x128xbf16, #tpu.memory_space<vmem>>, %arg5: memref<1x128xf32, #tpu.memory_space<vmem>>, %arg6: memref<16x128xf32, #tpu.memory_space<vmem>>) attributes {dimension_semantics = [#tpu.dimension_semantics<parallel>], iteration_bounds = array<i64: 1>, scalar_prefetch = 0 : i64, scratch_operands = 0 : i64, tpu.core_type = #tpu.core_type<tc>, window_params = [{transform_indices = @transform_0, window_bounds = array<i64: 16, 400>}, {pipeline_mode = #tpu.pipeline_mode<synchronous>, transform_indices = @transform_1, window_bounds = array<i64: 400, 256>}, {pipeline_mode = #tpu.pipeline_mode<synchronous>, transform_indices = @transform_2, window_bounds = array<i64: 1, 256>}, {pipeline_mode = #tpu.pipeline_mode<synchronous>, transform_indices = @transform_3, window_bounds = array<i64: 256, 128>}, {pipeline_mode = #tpu.pipeline_mode<synchronous>, transform_indices = @transform_4, window_bounds = array<i64: 1, 128>}, {transform_indices = @transform_5, window_bounds = array<i64: 16, 128>}]} {
    %c0 = arith.constant 0 : index
    %c0_0 = arith.constant 0 : index
    %0 = vector.load %arg1[%c0, %c0_0] : memref<16x400xf32, #tpu.memory_space<vmem>>, vector<16x400xf32>
    %1 = arith.truncf %0 : vector<16x400xf32> to vector<16x400xbf16>
    %c0_1 = arith.constant 0 : index
    %c0_2 = arith.constant 0 : index
    %2 = vector.load %arg2[%c0_1, %c0_2] : memref<400x256xbf16, #tpu.memory_space<vmem>>, vector<400x256xbf16>
    %cst = arith.constant dense<0.000000e+00> : vector<16x256xf32>
    %3 = tpu.matmul %1, %2, %cst {dimension_numbers = #tpu.dot_dimension_numbers<[1], [0], [0], [1], [0, 0, 1, 1], [], []>} : vector<16x400xbf16>, vector<400x256xbf16>, vector<16x256xf32> -> vector<16x256xf32>
    %c0_3 = arith.constant 0 : index
    %c0_4 = arith.constant 0 : index
    %4 = vector.load %arg3[%c0_3, %c0_4] : memref<1x256xf32, #tpu.memory_space<vmem>>, vector<1x256xf32>
    %5 = vector.broadcast %4 : vector<1x256xf32> to vector<16x256xf32>
    %6 = arith.addf %3, %5 : vector<16x256xf32>
    %cst_5 = arith.constant 0.000000e+00 : f32
    %7 = vector.broadcast %cst_5 : f32 to vector<16x256xf32>
    %8 = arith.maximumf %6, %7 : vector<16x256xf32>
    %9 = arith.truncf %8 : vector<16x256xf32> to vector<16x256xbf16>
    %c0_6 = arith.constant 0 : index
    %c0_7 = arith.constant 0 : index
    %10 = vector.load %arg4[%c0_6, %c0_7] : memref<256x128xbf16, #tpu.memory_space<vmem>>, vector<256x128xbf16>
    %cst_8 = arith.constant dense<0.000000e+00> : vector<16x128xf32>
    %11 = tpu.matmul %9, %10, %cst_8 {dimension_numbers = #tpu.dot_dimension_numbers<[1], [0], [0], [1], [0, 0, 1, 1], [], []>} : vector<16x256xbf16>, vector<256x128xbf16>, vector<16x128xf32> -> vector<16x128xf32>
    %c0_9 = arith.constant 0 : index
    %c0_10 = arith.constant 0 : index
    %12 = vector.load %arg5[%c0_9, %c0_10] : memref<1x128xf32, #tpu.memory_space<vmem>>, vector<1x128xf32>
    %13 = vector.broadcast %12 : vector<1x128xf32> to vector<16x128xf32>
    %14 = arith.addf %11, %13 : vector<16x128xf32>
    %cst_11 = arith.constant dense<0xFF800000> : vector<16xf32>
    %15 = vector.multi_reduction <maximumf>, %14, %cst_11 [1] : vector<16x128xf32> to vector<16xf32>
    %16 = vector.shape_cast %15 : vector<16xf32> to vector<16x1xf32>
    %17 = vector.broadcast %16 : vector<16x1xf32> to vector<16x128xf32>
    %18 = arith.subf %14, %17 : vector<16x128xf32>
    %19 = math.exp %18 : vector<16x128xf32>
    %cst_12 = arith.constant dense<0.000000e+00> : vector<16xf32>
    %20 = vector.multi_reduction <add>, %19, %cst_12 [1] : vector<16x128xf32> to vector<16xf32>
    %21 = vector.shape_cast %20 : vector<16xf32> to vector<16x1xf32>
    %22 = math.log %21 : vector<16x1xf32>
    %23 = vector.broadcast %22 : vector<16x1xf32> to vector<16x128xf32>
    %24 = arith.subf %18, %23 : vector<16x128xf32>
    %c0_13 = arith.constant 0 : index
    %c0_14 = arith.constant 0 : index
    %25 = vector.load %arg6[%c0_13, %c0_14] : memref<16x128xf32, #tpu.memory_space<vmem>>, vector<16x128xf32>
    tpu.vector_store %arg6[%c0_13, %c0_14], %24 {strides = array<i32>} : memref<16x128xf32, #tpu.memory_space<vmem>>, vector<16x128xf32>,
    return
  }
  func.func @transform_0(%arg0: i32) -> (i32, i32) {
    %c0_i32 = arith.constant 0 : i32
    %c0_i32_0 = arith.constant 0 : i32
    return %arg0, %c0_i32 : i32, i32
  }
  func.func @transform_1(%arg0: i32) -> (i32, i32) {
    %c0_i32 = arith.constant 0 : i32
    %c0_i32_0 = arith.constant 0 : i32
    %c0_i32_1 = arith.constant 0 : i32
    return %c0_i32, %c0_i32_0 : i32, i32
  }
  func.func @transform_2(%arg0: i32) -> (i32, i32) {
    %c0_i32 = arith.constant 0 : i32
    %c0_i32_0 = arith.constant 0 : i32
    %c0_i32_1 = arith.constant 0 : i32
    return %c0_i32, %c0_i32_0 : i32, i32
  }
  func.func @transform_3(%arg0: i32) -> (i32, i32) {
    %c0_i32 = arith.constant 0 : i32
    %c0_i32_0 = arith.constant 0 : i32
    %c0_i32_1 = arith.constant 0 : i32
    return %c0_i32, %c0_i32_0 : i32, i32
  }
  func.func @transform_4(%arg0: i32) -> (i32, i32) {
    %c0_i32 = arith.constant 0 : i32
    %c0_i32_0 = arith.constant 0 : i32
    %c0_i32_1 = arith.constant 0 : i32
    return %c0_i32, %c0_i32_0 : i32, i32
  }
  func.func @transform_5(%arg0: i32) -> (i32, i32) {
    %c0_i32 = arith.constant 0 : i32
    %c0_i32_0 = arith.constant 0 : i32
    return %arg0, %c0_i32 : i32, i32
  }
}

</mosaic_0001>

<llo_original>
// kernel: tpu_custom_call.1
$region0: #{tpu_custom_call.1}
  #allocation0 [shape = 'u32[]', space=smem, size = 0x4, offset = 0x4, fixed_abs, tag = 'smem constant byte address 0x4 - core index']
  #allocation1 [shape = 'u32[72,128]{1,0:T(1,128)}', space=vmem, size = 0x9000, scoped, tag = 'internal scratch']
  %s0 = inlined_call_operand.hbm [shape: f32[16,400], index: 0, kind: input, shape index: {}]
  %s1 = inlined_call_operand.hbm [shape: bf16[400,256], index: 1, kind: input, shape index: {}]
  %s2 = inlined_call_operand.hbm [shape: f32[1,256], index: 2, kind: input, shape index: {}]
  %s3 = inlined_call_operand.hbm [shape: bf16[256,128], index: 3, kind: input, shape index: {}]
  %s4 = inlined_call_operand.vmem [shape: f32[1,128], index: 4, kind: input, shape index: {}]
  %s5 = inlined_call_operand.hbm [shape: f32[16,128], index: 5, kind: output, shape index: {}]
  %s6 = sld [smem:[#allocation0]]
  $region46: #{tpu_custom_call.1} parent=0
    _
  %s8 = ssub.s32 1, %s6
  %s9 = scalar_select 0, %s8, %s6
  $region1: #{tpu_custom_call.1} parent=0
    #allocation2 [shape = 'u8[32768]{0}', space=vmem, size = 0x8000, scoped, tag = 'input window, operand 0, single buffered']
    #allocation3 [shape = 's32[1]{0}', space=sflag, size = 0x4, scoped, tag = 'scoped memory for tpu_custom_call.1']
    #allocation4 [shape = 's32[1]{0}', space=sflag, size = 0x4, scoped, tag = 'scoped memory for tpu_custom_call.1']
    #allocation5 [shape = 'u8[204800]{0}', space=vmem, size = 0x32000, scoped, tag = 'input window, operand 1, single buffered']
    #allocation6 [shape = 's32[1]{0}', space=sflag, size = 0x4, scoped, tag = 'scoped memory for tpu_custom_call.1']
    #allocation7 [shape = 'u8[1024]{0}', space=vmem, size = 0x400, scoped, tag = 'input window, operand 2, single buffered']
    #allocation8 [shape = 'u8[65536]{0}', space=vmem, size = 0x10000, scoped, tag = 'input window, operand 3, single buffered']
    #allocation9 [shape = 's32[1]{0}', space=sflag, size = 0x4, scoped, tag = 'scoped memory for tpu_custom_call.1']
    #allocation10 [shape = 'u8[8192]{0}', space=vmem, size = 0x2000, scoped, tag = 'output window, operand 0, single buffered']
    %10 = vsyncpa [#allocation3], 0
    %11 = vsyncpa [#allocation6], 0
    %12 = vsyncpa [#allocation9], 0
    %13 = vsyncpa [#allocation4], 0
    // Predicated region
    $region2: #{tpu_custom_call.1} parent=1 // pred_check
      _
    $region3: #{tpu_custom_call.1} parent=1 // pred_check_branch
      %15 = sbr.rel (0) target = $region5
    $region4: #{tpu_custom_call.1} parent=1 // pred_region
      %17 = vsyncadd [#allocation3], 0
      %s18 = sshll.u32 %s0, 4
      %s19 = int_to_ptr.hbm [resolvable:$true] %s18
      %s20 = sshll.u32 [#allocation2], 4
      %s21 = int_to_ptr.vmem [resolvable:$true] %s20
      %26 = dma.hbm_to_vmem [thread:$0]  %s19, 1024, %s21, [#allocation3], 512, 512, 32
    $region5: #{tpu_custom_call.1} parent=1 // pred_fallthru
      _
    // Predicated region
    $region6: #{tpu_custom_call.1} parent=1 // pred_check
      _
    $region7: #{tpu_custom_call.1} parent=1 // pred_check_branch
      %28 = sbr.rel (0) target = $region9
    $region8: #{tpu_custom_call.1} parent=1 // pred_region
      %30 = vsyncadd [#allocation6], 0
      %s31 = sshll.u32 %s1, 4
      %s32 = int_to_ptr.hbm [resolvable:$true] %s31
      %s33 = sshll.u32 [#allocation5], 4
      %s34 = int_to_ptr.vmem [resolvable:$true] %s33
      %39 = dma.hbm_to_vmem [thread:$0]  %s32, 6400, %s34, [#allocation6], 128, 128, 8
    $region9: #{tpu_custom_call.1} parent=1 // pred_fallthru
      _
    // Predicated region
    $region10: #{tpu_custom_call.1} parent=1 // pred_check
      _
    $region11: #{tpu_custom_call.1} parent=1 // pred_check_branch
      %41 = sbr.rel (0) target = $region13
    $region12: #{tpu_custom_call.1} parent=1 // pred_region
      %43 = vsyncadd [#allocation6], 0
      %s45 = sshll.u32 %s2, 4
      %s46 = int_to_ptr.hbm [resolvable:$true] %s45
      %s47 = sshll.u32 [#allocation7], 4
      %s48 = int_to_ptr.vmem [resolvable:$true] %s47
      %50 = dma.hbm_to_vmem [thread:$0]  %s46, 32, %s48, [#allocation6]
    $region13: #{tpu_custom_call.1} parent=1 // pred_fallthru
      _
    // Predicated region
    $region14: #{tpu_custom_call.1} parent=1 // pred_check
      _
    $region15: #{tpu_custom_call.1} parent=1 // pred_check_branch
      %52 = sbr.rel (0) target = $region17
    $region16: #{tpu_custom_call.1} parent=1 // pred_region
      %54 = vsyncadd [#allocation9], 0
      %s55 = sshll.u32 %s3, 4
      %s56 = int_to_ptr.hbm [resolvable:$true] %s55
      %s57 = sshll.u32 [#allocation8], 4
      %s58 = int_to_ptr.vmem [resolvable:$true] %s57
      %63 = dma.hbm_to_vmem [thread:$0]  %s56, 2048, %s58, [#allocation9], 64, 64, 4
    $region17: #{tpu_custom_call.1} parent=1 // pred_fallthru
      _
    // Predicated region
    $region18: #{tpu_custom_call.1} parent=1 // pred_check
      _
    $region19: #{tpu_custom_call.1} parent=1 // pred_check_branch
      %65 = sbr.rel (0) target = $region21
    $region20: #{tpu_custom_call.1} parent=1 // pred_region
      _
    $region21: #{tpu_custom_call.1} parent=1 // pred_fallthru
      _
    // Predicated region
    $region22: #{tpu_custom_call.1} parent=1 // pred_check
      _
    $region23: #{tpu_custom_call.1} parent=1 // pred_check_branch
      %67 = sbr.rel (0) target = $region25
    $region24: #{tpu_custom_call.1} parent=1 // pred_region
      %69 = dma.done [#allocation3], 1024
    $region25: #{tpu_custom_call.1} parent=1 // pred_fallthru
      _
    // Predicated region
    $region26: #{tpu_custom_call.1} parent=1 // pred_check
      _
    $region27: #{tpu_custom_call.1} parent=1 // pred_check_branch
      %71 = sbr.rel (0) target = $region29
    $region28: #{tpu_custom_call.1} parent=1 // pred_region
      %73 = dma.done [#allocation6], 6400
    $region29: #{tpu_custom_call.1} parent=1 // pred_fallthru
      _
    // Predicated region
    $region30: #{tpu_custom_call.1} parent=1 // pred_check
      _
    $region31: #{tpu_custom_call.1} parent=1 // pred_check_branch
      %75 = sbr.rel (0) target = $region33
    $region32: #{tpu_custom_call.1} parent=1 // pred_region
      %77 = dma.done [#allocation6], 32
    $region33: #{tpu_custom_call.1} parent=1 // pred_fallthru
      _
    // Predicated region
    $region34: #{tpu_custom_call.1} parent=1 // pred_check
      _
    $region35: #{tpu_custom_call.1} parent=1 // pred_check_branch
      %79 = sbr.rel (0) target = $region37
    $region36: #{tpu_custom_call.1} parent=1 // pred_region
      %81 = dma.done [#allocation9], 2048
    $region37: #{tpu_custom_call.1} parent=1 // pred_fallthru
      _
    %v83 = vld [vmem:[#allocation2] sm:$0xff]
    %v84 = vld [vmem:[#allocation2 + $0x8] sm:$0xff]
    %v85 = vld [vmem:[#allocation2 + $0x10] sm:$0xff]
    %v86 = vld [vmem:[#allocation2 + $0x18] sm:$0xff]
    %v87 = vld [vmem:[#allocation2 + $0x20] sm:$0xff]
    %v88 = vld [vmem:[#allocation2 + $0x28] sm:$0xff]
    %v89 = vld [vmem:[#allocation2 + $0x30] sm:$0xff]
    %v90 = vld [vmem:[#allocation2 + $0x38] sm:$0xff]
    %v91 = vpack.c.bf16 %v87, %v83
    %v92 = vpack.c.bf16 %v88, %v84
    %v93 = vpack.c.bf16 %v89, %v85
    %v94 = vpack.c.bf16 %v90, %v86
    %v95 = vld [vmem:[#allocation5] sm:$0xff]
    %v96 = vld [vmem:[#allocation5 + $0x8] sm:$0xff]
    %v97 = vld [vmem:[#allocation5 + $0x10] sm:$0xff]
    %v98 = vld [vmem:[#allocation5 + $0x18] sm:$0xff]
    %v99 = vld [vmem:[#allocation5 + $0x20] sm:$0xff]
    %v100 = vld [vmem:[#allocation5 + $0x28] sm:$0xff]
    %v101 = vld [vmem:[#allocation5 + $0x30] sm:$0xff]
    %v102 = vld [vmem:[#allocation5 + $0x38] sm:$0xff]
    %v103 = vld [vmem:[#allocation5 + $0x40] sm:$0xff]
    %v104 = vld [vmem:[#allocation5 + $0x48] sm:$0xff]
    %v105 = vld [vmem:[#allocation5 + $0x50] sm:$0xff]
    %v106 = vld [vmem:[#allocation5 + $0x58] sm:$0xff]
    %v107 = vld [vmem:[#allocation5 + $0x60] sm:$0xff]
    %v108 = vld [vmem:[#allocation5 + $0x68] sm:$0xff]
    %v109 = vld [vmem:[#allocation5 + $0x70] sm:$0xff]
    %v110 = vld [vmem:[#allocation5 + $0x78] sm:$0xff]
    %v111 = vld [vmem:[#allocation5 + $0x80] sm:$0xff]
    %v112 = vld [vmem:[#allocation5 + $0x88] sm:$0xff]
    %v113 = vld [vmem:[#allocation5 + $0x90] sm:$0xff]
    %v114 = vld [vmem:[#allocation5 + $0x98] sm:$0xff]
    %v115 = vld [vmem:[#allocation5 + $0xa0] sm:$0xff]
    %v116 = vld [vmem:[#allocation5 + $0xa8] sm:$0xff]
    %v117 = vld [vmem:[#allocation5 + $0xb0] sm:$0xff]
    %v118 = vld [vmem:[#allocation5 + $0xb8] sm:$0xff]
    %v119 = vld [vmem:[#allocation5 + $0xc0] sm:$0xff]
    %v120 = vld [vmem:[#allocation5 + $0xc8] sm:$0xff]
    %v121 = vld [vmem:[#allocation5 + $0xd0] sm:$0xff]
    %v122 = vld [vmem:[#allocation5 + $0xd8] sm:$0xff]
    %v123 = vld [vmem:[#allocation5 + $0xe0] sm:$0xff]
    %v124 = vld [vmem:[#allocation5 + $0xe8] sm:$0xff]
    %v125 = vld [vmem:[#allocation5 + $0xf0] sm:$0xff]
    %v126 = vld [vmem:[#allocation5 + $0xf8] sm:$0xff]
    %v127 = vld [vmem:[#allocation5 + $0x100] sm:$0xff]
    %v128 = vld [vmem:[#allocation5 + $0x108] sm:$0xff]
    %v129 = vld [vmem:[#allocation5 + $0x110] sm:$0xff]
    %v130 = vld [vmem:[#allocation5 + $0x118] sm:$0xff]
    %v131 = vld [vmem:[#allocation5 + $0x120] sm:$0xff]
    %v132 = vld [vmem:[#allocation5 + $0x128] sm:$0xff]
    %v133 = vld [vmem:[#allocation5 + $0x130] sm:$0xff]
    %v134 = vld [vmem:[#allocation5 + $0x138] sm:$0xff]
    %v135 = vld [vmem:[#allocation5 + $0x140] sm:$0xff]
    %v136 = vld [vmem:[#allocation5 + $0x148] sm:$0xff]
    %v137 = vld [vmem:[#allocation5 + $0x150] sm:$0xff]
    %v138 = vld [vmem:[#allocation5 + $0x158] sm:$0xff]
    %v139 = vld [vmem:[#allocation5 + $0x160] sm:$0xff]
    %v140 = vld [vmem:[#allocation5 + $0x168] sm:$0xff]
    %v141 = vld [vmem:[#allocation5 + $0x170] sm:$0xff]
    %v142 = vld [vmem:[#allocation5 + $0x178] sm:$0xff]
    %v143 = vld [vmem:[#allocation5 + $0x180] sm:$0xff]
    %v144 = vld [vmem:[#allocation5 + $0x188] sm:$0xff]
    %v145 = vld [vmem:[#allocation7] sm:$0x3]
    %v147 = vperm.slane %v145, 0
    %v148 = vperm.slane %v145, 1
    %v201 = vunpack.c.l.b16 %v95
    %v202 = vunpack.c.h.b16 %v95
    %v203 = vunpack.c.l.b16 %v96
    %v204 = vunpack.c.h.b16 %v96
    %v205 = vunpack.c.l.b16 %v97
    %v206 = vunpack.c.h.b16 %v97
    %v207 = vunpack.c.l.b16 %v98
    %v208 = vunpack.c.h.b16 %v98
    %v209 = vunpack.c.l.b16 %v99
    %v210 = vunpack.c.h.b16 %v99
    %v211 = vunpack.c.l.b16 %v100
    %v212 = vunpack.c.h.b16 %v100
    %v213 = vunpack.c.l.b16 %v101
    %v214 = vunpack.c.h.b16 %v101
    %v215 = vunpack.c.l.b16 %v102
    %v216 = vunpack.c.h.b16 %v102
    %v217 = vunpack.c.l.b16 %v103
    %v218 = vunpack.c.h.b16 %v103
    %v219 = vunpack.c.l.b16 %v104
    %v220 = vunpack.c.h.b16 %v104
    %v221 = vunpack.c.l.b16 %v105
    %v222 = vunpack.c.h.b16 %v105
    %v223 = vunpack.c.l.b16 %v106
    %v224 = vunpack.c.h.b16 %v106
    %v225 = vunpack.c.l.b16 %v107
    %v226 = vunpack.c.h.b16 %v107
    %v227 = vunpack.c.l.b16 %v108
    %v228 = vunpack.c.h.b16 %v108
    %v229 = vunpack.c.l.b16 %v109
    %v230 = vunpack.c.h.b16 %v109
    %v231 = vunpack.c.l.b16 %v110
    %v232 = vunpack.c.h.b16 %v110
    %v233 = vunpack.c.l.b16 %v111
    %v234 = vunpack.c.h.b16 %v111
    %v235 = vunpack.c.l.b16 %v112
    %v236 = vunpack.c.h.b16 %v112
    %v237 = vunpack.c.l.b16 %v113
    %v238 = vunpack.c.h.b16 %v113
    %v239 = vunpack.c.l.b16 %v114
    %v240 = vunpack.c.h.b16 %v114
    %v241 = vunpack.c.l.b16 %v115
    %v242 = vunpack.c.h.b16 %v115
    %v243 = vunpack.c.l.b16 %v116
    %v244 = vunpack.c.h.b16 %v116
    %v245 = vunpack.c.l.b16 %v117
    %v246 = vunpack.c.h.b16 %v117
    %v247 = vunpack.c.l.b16 %v118
    %v248 = vunpack.c.h.b16 %v118
    %v249 = vunpack.c.l.b16 %v119
    %v250 = vunpack.c.h.b16 %v119
    %v251 = vunpack.c.l.b16 %v120
    %v252 = vunpack.c.h.b16 %v120
    %v253 = vunpack.c.l.b16 %v121
    %v254 = vunpack.c.h.b16 %v121
    %v255 = vunpack.c.l.b16 %v122
    %v256 = vunpack.c.h.b16 %v122
    %v257 = vunpack.c.l.b16 %v123
    %v258 = vunpack.c.h.b16 %v123
    %v259 = vunpack.c.l.b16 %v124
    %v260 = vunpack.c.h.b16 %v124
    %v261 = vunpack.c.l.b16 %v125
    %v262 = vunpack.c.h.b16 %v125
    %v263 = vunpack.c.l.b16 %v126
    %v264 = vunpack.c.h.b16 %v126
    %v265 = vunpack.c.l.b16 %v127
    %v266 = vunpack.c.h.b16 %v127
    %v267 = vunpack.c.l.b16 %v128
    %v268 = vunpack.c.h.b16 %v128
    %v269 = vunpack.c.l.b16 %v129
    %v270 = vunpack.c.h.b16 %v129
    %v271 = vunpack.c.l.b16 %v130
    %v272 = vunpack.c.h.b16 %v130
    %v273 = vunpack.c.l.b16 %v131
    %v274 = vunpack.c.h.b16 %v131
    %v275 = vunpack.c.l.b16 %v132
    %v276 = vunpack.c.h.b16 %v132
    %v277 = vunpack.c.l.b16 %v133
    %v278 = vunpack.c.h.b16 %v133
    %v279 = vunpack.c.l.b16 %v134
    %v280 = vunpack.c.h.b16 %v134
    %v281 = vunpack.c.l.b16 %v135
    %v282 = vunpack.c.h.b16 %v135
    %v283 = vunpack.c.l.b16 %v136
    %v284 = vunpack.c.h.b16 %v136
    %v285 = vunpack.c.l.b16 %v137
    %v286 = vunpack.c.h.b16 %v137
    %v287 = vunpack.c.l.b16 %v138
    %v288 = vunpack.c.h.b16 %v138
    %v289 = vunpack.c.l.b16 %v139
    %v290 = vunpack.c.h.b16 %v139
    %v291 = vunpack.c.l.b16 %v140
    %v292 = vunpack.c.h.b16 %v140
    %v293 = vunpack.c.l.b16 %v141
    %v294 = vunpack.c.h.b16 %v141
    %v295 = vunpack.c.l.b16 %v142
    %v296 = vunpack.c.h.b16 %v142
    %v297 = vunpack.c.l.b16 %v143
    %v298 = vunpack.c.h.b16 %v143
    %v299 = vunpack.c.l.b16 %v144
    %v300 = vunpack.c.h.b16 %v144
    %v301 = vpack.c.b16 %v203, %v201
    %v302 = vpack.c.b16 %v204, %v202
    %v303 = vpack.c.b16 %v207, %v205
    %v304 = vpack.c.b16 %v208, %v206
    %v305 = vpack.c.b16 %v211, %v209
    %v306 = vpack.c.b16 %v212, %v210
    %v307 = vpack.c.b16 %v215, %v213
    %v308 = vpack.c.b16 %v216, %v214
    %v309 = vpack.c.b16 %v219, %v217
    %v310 = vpack.c.b16 %v220, %v218
    %v311 = vpack.c.b16 %v223, %v221
    %v312 = vpack.c.b16 %v224, %v222
    %v313 = vpack.c.b16 %v227, %v225
    %v314 = vpack.c.b16 %v228, %v226
    %v315 = vpack.c.b16 %v231, %v229
    %v316 = vpack.c.b16 %v232, %v230
    %v317 = vpack.c.b16 %v235, %v233
    %v318 = vpack.c.b16 %v236, %v234
    %v319 = vpack.c.b16 %v239, %v237
    %v320 = vpack.c.b16 %v240, %v238
    %v321 = vpack.c.b16 %v243, %v241
    %v322 = vpack.c.b16 %v244, %v242
    %v323 = vpack.c.b16 %v247, %v245
    %v324 = vpack.c.b16 %v248, %v246
    %v325 = vpack.c.b16 %v251, %v249
    %v326 = vpack.c.b16 %v252, %v250
    %v327 = vpack.c.b16 %v255, %v253
    %v328 = vpack.c.b16 %v256, %v254
    %v329 = vpack.c.b16 %v259, %v257
    %v330 = vpack.c.b16 %v260, %v258
    %v331 = vpack.c.b16 %v263, %v261
    %v332 = vpack.c.b16 %v264, %v262
    %v333 = vpack.c.b16 %v267, %v265
    %v334 = vpack.c.b16 %v268, %v266
    %v335 = vpack.c.b16 %v271, %v269
    %v336 = vpack.c.b16 %v272, %v270
    %v337 = vpack.c.b16 %v275, %v273
    %v338 = vpack.c.b16 %v276, %v274
    %v339 = vpack.c.b16 %v279, %v277
    %v340 = vpack.c.b16 %v280, %v278
    %v341 = vpack.c.b16 %v283, %v281
    %v342 = vpack.c.b16 %v284, %v282
    %v343 = vpack.c.b16 %v287, %v285
    %v344 = vpack.c.b16 %v288, %v286
    %v345 = vpack.c.b16 %v291, %v289
    %v346 = vpack.c.b16 %v292, %v290
    %v347 = vpack.c.b16 %v295, %v293
    %v348 = vpack.c.b16 %v296, %v294
    %v349 = vpack.c.b16 %v299, %v297
    %v350 = vpack.c.b16 %v300, %v298
    %vm401 = vcmask 130048
    %v403 = vsel %vm401, %v94, 0
    %405 = vmatpush.bf16.msra.mxu0 %v315
    %406 = vmatpush.bf16.msra.mxu0 %v313
    %407 = vmatpush.bf16.msra.mxu0 %v311
    %408 = vmatpush.bf16.msra.mxu0 %v309
    %409 = vmatpush.bf16.msra.mxu0 %v307
    %410 = vmatpush.bf16.msra.mxu0 %v305
    %411 = vmatpush.bf16.msra.mxu0 %v303
    %412 = vmatpush.bf16.msra.mxu0 %v301
    %413 = vmatmul.bf16.gmra.mxu0 %v91
    %v414 = vpop.f32.mrf.mxu0
    %v415 = vadd.f32 %v147, %v414
    %v416 = vpop.f32.mrf.mxu0
    %v417 = vadd.f32 %v147, %v416
    %418 = vdwg.mxu0
    %419 = vmatpush.bf16.msra.mxu0 %v331
    %420 = vmatpush.bf16.msra.mxu0 %v329
    %421 = vmatpush.bf16.msra.mxu0 %v327
    %422 = vmatpush.bf16.msra.mxu0 %v325
    %423 = vmatpush.bf16.msra.mxu0 %v323
    %424 = vmatpush.bf16.msra.mxu0 %v321
    %425 = vmatpush.bf16.msra.mxu0 %v319
    %426 = vmatpush.bf16.msra.mxu0 %v317
    %427 = vmatmul.bf16.gmra.mxu0 %v92
    %v428 = vpop.f32.mrf.mxu0
    %v429 = vadd.f32 %v415, %v428
    %v430 = vpop.f32.mrf.mxu0
    %v431 = vadd.f32 %v417, %v430
    %432 = vdwg.mxu0
    %433 = vmatpush.bf16.msra.mxu0 %v347
    %434 = vmatpush.bf16.msra.mxu0 %v345
    %435 = vmatpush.bf16.msra.mxu0 %v343
    %436 = vmatpush.bf16.msra.mxu0 %v341
    %437 = vmatpush.bf16.msra.mxu0 %v339
    %438 = vmatpush.bf16.msra.mxu0 %v337
    %439 = vmatpush.bf16.msra.mxu0 %v335
    %440 = vmatpush.bf16.msra.mxu0 %v333
    %441 = vmatmul.bf16.gmra.mxu0 %v93
    %v442 = vpop.f32.mrf.mxu0
    %v443 = vadd.f32 %v429, %v442
    %v444 = vpop.f32.mrf.mxu0
    %v445 = vadd.f32 %v431, %v444
    %446 = vdwg.mxu0
    %447 = vmatpush.bf16.msra.mxu0 0
    %448 = vmatpush.bf16.msra.mxu0 0
    %449 = vmatpush.bf16.msra.mxu0 0
    %450 = vmatpush.bf16.msra.mxu0 0
    %451 = vmatpush.bf16.msra.mxu0 0
    %452 = vmatpush.bf16.msra.mxu0 0
    %453 = vmatpush.bf16.msra.mxu0 0
    %454 = vmatpush.bf16.msra.mxu0 %v349
    %455 = vmatmul.bf16.gmra.mxu0 %v403
    %v456 = vpop.f32.mrf.mxu0
    %v457 = vadd.f32 %v443, %v456
    %v458 = vpop.f32.mrf.mxu0
    %v459 = vadd.f32 %v445, %v458
    %460 = vdwg.mxu0
    %461 = vmatpush.bf16.msra.mxu0 %v316
    %462 = vmatpush.bf16.msra.mxu0 %v314
    %463 = vmatpush.bf16.msra.mxu0 %v312
    %464 = vmatpush.bf16.msra.mxu0 %v310
    %465 = vmatpush.bf16.msra.mxu0 %v308
    %466 = vmatpush.bf16.msra.mxu0 %v306
    %467 = vmatpush.bf16.msra.mxu0 %v304
    %468 = vmatpush.bf16.msra.mxu0 %v302
    %469 = vmatmul.bf16.gmra.mxu0 %v91
    %v470 = vpop.f32.mrf.mxu0
    %v471 = vadd.f32 %v148, %v470
    %v472 = vpop.f32.mrf.mxu0
    %v473 = vadd.f32 %v148, %v472
    %474 = vdwg.mxu0
    %475 = vmatpush.bf16.msra.mxu0 %v332
    %476 = vmatpush.bf16.msra.mxu0 %v330
    %477 = vmatpush.bf16.msra.mxu0 %v328
    %478 = vmatpush.bf16.msra.mxu0 %v326
    %479 = vmatpush.bf16.msra.mxu0 %v324
    %480 = vmatpush.bf16.msra.mxu0 %v322
    %481 = vmatpush.bf16.msra.mxu0 %v320
    %482 = vmatpush.bf16.msra.mxu0 %v318
    %483 = vmatmul.bf16.gmra.mxu0 %v92
    %v484 = vpop.f32.mrf.mxu0
    %v485 = vadd.f32 %v471, %v484
    %v486 = vpop.f32.mrf.mxu0
    %v487 = vadd.f32 %v473, %v486
    %488 = vdwg.mxu0
    %489 = vmatpush.bf16.msra.mxu0 %v348
    %490 = vmatpush.bf16.msra.mxu0 %v346
    %491 = vmatpush.bf16.msra.mxu0 %v344
    %492 = vmatpush.bf16.msra.mxu0 %v342
    %493 = vmatpush.bf16.msra.mxu0 %v340
    %494 = vmatpush.bf16.msra.mxu0 %v338
    %495 = vmatpush.bf16.msra.mxu0 %v336
    %496 = vmatpush.bf16.msra.mxu0 %v334
    %497 = vmatmul.bf16.gmra.mxu0 %v93
    %v498 = vpop.f32.mrf.mxu0
    %v499 = vadd.f32 %v485, %v498
    %v500 = vpop.f32.mrf.mxu0
    %v501 = vadd.f32 %v487, %v500
    %502 = vdwg.mxu0
    %503 = vmatpush.bf16.msra.mxu0 0
    %504 = vmatpush.bf16.msra.mxu0 0
    %505 = vmatpush.bf16.msra.mxu0 0
    %506 = vmatpush.bf16.msra.mxu0 0
    %507 = vmatpush.bf16.msra.mxu0 0
    %508 = vmatpush.bf16.msra.mxu0 0
    %509 = vmatpush.bf16.msra.mxu0 0
    %510 = vmatpush.bf16.msra.mxu0 %v350
    %511 = vmatmul.bf16.gmra.mxu0 %v403
    %v512 = vpop.f32.mrf.mxu0
    %v513 = vadd.f32 %v499, %v512
    %v514 = vpop.f32.mrf.mxu0
    %v515 = vadd.f32 %v501, %v514
    %516 = vdwg.mxu0
    %v517 = vmax.f32 %v457, 0.0
    %v518 = vmax.f32 %v513, 0.0
    %v519 = vmax.f32 %v459, 0.0
    %v520 = vmax.f32 %v515, 0.0
    %v521 = vpack.c.bf16 %v519, %v517
    %v522 = vpack.c.bf16 %v520, %v518
    %v523 = vld [vmem:[#allocation8] sm:$0xf]
    %v524 = vld [vmem:[#allocation8 + $0x4] sm:$0xf]
    %v525 = vld [vmem:[#allocation8 + $0x8] sm:$0xf]
    %v526 = vld [vmem:[#allocation8 + $0xc] sm:$0xf]
    %v527 = vld [vmem:[#allocation8 + $0x10] sm:$0xf]
    %v528 = vld [vmem:[#allocation8 + $0x14] sm:$0xf]
    %v529 = vld [vmem:[#allocation8 + $0x18] sm:$0xf]
    %v530 = vld [vmem:[#allocation8 + $0x1c] sm:$0xf]
    %v531 = vld [vmem:[#allocation8 + $0x20] sm:$0xf]
    %v532 = vld [vmem:[#allocation8 + $0x24] sm:$0xf]
    %v533 = vld [vmem:[#allocation8 + $0x28] sm:$0xf]
    %v534 = vld [vmem:[#allocation8 + $0x2c] sm:$0xf]
    %v535 = vld [vmem:[#allocation8 + $0x30] sm:$0xf]
    %v536 = vld [vmem:[#allocation8 + $0x34] sm:$0xf]
    %v537 = vld [vmem:[#allocation8 + $0x38] sm:$0xf]
    %v538 = vld [vmem:[#allocation8 + $0x3c] sm:$0xf]
    %v539 = vld [vmem:[#allocation8 + $0x40] sm:$0xf]
    %v540 = vld [vmem:[#allocation8 + $0x44] sm:$0xf]
    %v541 = vld [vmem:[#allocation8 + $0x48] sm:$0xf]
    %v542 = vld [vmem:[#allocation8 + $0x4c] sm:$0xf]
    %v543 = vld [vmem:[#allocation8 + $0x50] sm:$0xf]
    %v544 = vld [vmem:[#allocation8 + $0x54] sm:$0xf]
    %v545 = vld [vmem:[#allocation8 + $0x58] sm:$0xf]
    %v546 = vld [vmem:[#allocation8 + $0x5c] sm:$0xf]
    %v547 = vld [vmem:[#allocation8 + $0x60] sm:$0xf]
    %v548 = vld [vmem:[#allocation8 + $0x64] sm:$0xf]
    %v549 = vld [vmem:[#allocation8 + $0x68] sm:$0xf]
    %v550 = vld [vmem:[#allocation8 + $0x6c] sm:$0xf]
    %v551 = vld [vmem:[#allocation8 + $0x70] sm:$0xf]
    %v552 = vld [vmem:[#allocation8 + $0x74] sm:$0xf]
    %v553 = vld [vmem:[#allocation8 + $0x78] sm:$0xf]
    %v554 = vld [vmem:[#allocation8 + $0x7c] sm:$0xf]
    %v555 = vld [vmem:[%s4] sm:$0x1]
    %v557 = vperm.slane %v555, 0
    %v591 = vunpack.c.l.b16 %v523
    %v592 = vunpack.c.l.b16 %v524
    %v593 = vunpack.c.l.b16 %v525
    %v594 = vunpack.c.l.b16 %v526
    %v595 = vunpack.c.l.b16 %v527
    %v596 = vunpack.c.l.b16 %v528
    %v597 = vunpack.c.l.b16 %v529
    %v598 = vunpack.c.l.b16 %v530
    %v599 = vunpack.c.l.b16 %v531
    %v600 = vunpack.c.l.b16 %v532
    %v601 = vunpack.c.l.b16 %v533
    %v602 = vunpack.c.l.b16 %v534
    %v603 = vunpack.c.l.b16 %v535
    %v604 = vunpack.c.l.b16 %v536
    %v605 = vunpack.c.l.b16 %v537
    %v606 = vunpack.c.l.b16 %v538
    %v607 = vunpack.c.l.b16 %v539
    %v608 = vunpack.c.l.b16 %v540
    %v609 = vunpack.c.l.b16 %v541
    %v610 = vunpack.c.l.b16 %v542
    %v611 = vunpack.c.l.b16 %v543
    %v612 = vunpack.c.l.b16 %v544
    %v613 = vunpack.c.l.b16 %v545
    %v614 = vunpack.c.l.b16 %v546
    %v615 = vunpack.c.l.b16 %v547
    %v616 = vunpack.c.l.b16 %v548
    %v617 = vunpack.c.l.b16 %v549
    %v618 = vunpack.c.l.b16 %v550
    %v619 = vunpack.c.l.b16 %v551
    %v620 = vunpack.c.l.b16 %v552
    %v621 = vunpack.c.l.b16 %v553
    %v622 = vunpack.c.l.b16 %v554
    %v623 = vpack.c.b16 %v592, %v591
    %v624 = vpack.c.b16 %v594, %v593
    %v625 = vpack.c.b16 %v596, %v595
    %v626 = vpack.c.b16 %v598, %v597
    %v627 = vpack.c.b16 %v600, %v599
    %v628 = vpack.c.b16 %v602, %v601
    %v629 = vpack.c.b16 %v604, %v603
    %v630 = vpack.c.b16 %v606, %v605
    %v631 = vpack.c.b16 %v608, %v607
    %v632 = vpack.c.b16 %v610, %v609
    %v633 = vpack.c.b16 %v612, %v611
    %v634 = vpack.c.b16 %v614, %v613
    %v635 = vpack.c.b16 %v616, %v615
    %v636 = vpack.c.b16 %v618, %v617
    %v637 = vpack.c.b16 %v620, %v619
    %v638 = vpack.c.b16 %v622, %v621
    %655 = vmatpush.bf16.msra.mxu0 %v630
    %656 = vmatpush.bf16.msra.mxu0 %v629
    %657 = vmatpush.bf16.msra.mxu0 %v628
    %658 = vmatpush.bf16.msra.mxu0 %v627
    %659 = vmatpush.bf16.msra.mxu0 %v626
    %660 = vmatpush.bf16.msra.mxu0 %v625
    %661 = vmatpush.bf16.msra.mxu0 %v624
    %662 = vmatpush.bf16.msra.mxu0 %v623
    %663 = vmatmul.bf16.gmra.mxu0 %v521
    %v664 = vpop.f32.mrf.mxu0
    %v665 = vadd.f32 %v557, %v664
    %v666 = vpop.f32.mrf.mxu0
    %v667 = vadd.f32 %v557, %v666
    %668 = vdwg.mxu0
    %669 = vmatpush.bf16.msra.mxu0 %v638
    %670 = vmatpush.bf16.msra.mxu0 %v637
    %671 = vmatpush.bf16.msra.mxu0 %v636
    %672 = vmatpush.bf16.msra.mxu0 %v635
    %673 = vmatpush.bf16.msra.mxu0 %v634
    %674 = vmatpush.bf16.msra.mxu0 %v633
    %675 = vmatpush.bf16.msra.mxu0 %v632
    %676 = vmatpush.bf16.msra.mxu0 %v631
    %677 = vmatmul.bf16.gmra.mxu0 %v522
    %v678 = vpop.f32.mrf.mxu0
    %v679 = vadd.f32 %v665, %v678
    %v680 = vpop.f32.mrf.mxu0
    %v681 = vadd.f32 %v667, %v680
    %682 = vdwg.mxu0
    %683 = vmax.xlane.f32.xlu0 %v679
    %v684 = vpop.xlane.xlu0 %683
    %685 = vmax.xlane.f32.xlu0 %v681
    %v686 = vpop.xlane.xlu0 %685
    %v687 = vsub.f32 %v679, %v684
    %v688 = vsub.f32 %v681, %v686
    %v689 = vmul.f32 %v687, 1.442695
    %v690 = vpow.pop %v689
    %v691 = vmul.f32 %v688, 1.442695
    %v692 = vpow.pop %v691
    %693 = vadd.xlane.f32.xlu0 %v690
    %v694 = vpop.xlane.xlu0 %693
    %695 = vadd.xlane.f32.xlu0 %v692
    %v696 = vpop.xlane.xlu0 %695
    %v697 = vlog2.pop %v694
    %v698 = vmul.f32 %v697, 0.6931472
    %v699 = vlog2.pop %v696
    %v700 = vmul.f32 %v699, 0.6931472
    %v701 = vsub.f32 %v687, %v698
    %v702 = vsub.f32 %v688, %v700
    %703 = vst [vmem:[#allocation10] sm:$0xff] %v701
    %704 = vst [vmem:[#allocation10 + $0x8] sm:$0xff] %v702
    // Predicated region
    $region38: #{tpu_custom_call.1} parent=1 // pred_check
      _
    $region39: #{tpu_custom_call.1} parent=1 // pred_check_branch
      %706 = sbr.rel (0) target = $region41
    $region40: #{tpu_custom_call.1} parent=1 // pred_region
      %708 = vsyncadd [#allocation4], 0
      %s709 = sshll.u32 [#allocation10], 4
      %s710 = int_to_ptr.vmem [resolvable:$true] %s709
      %s711 = sshll.u32 %s5, 4
      %s712 = int_to_ptr.hbm [resolvable:$true] %s711
      %717 = dma.vmem_to_hbm [thread:$0]  %s710, 256, %s712, [#allocation4], 128, 128, 8
    $region41: #{tpu_custom_call.1} parent=1 // pred_fallthru
      _
    // Predicated region
    $region42: #{tpu_custom_call.1} parent=1 // pred_check
      _
    $region43: #{tpu_custom_call.1} parent=1 // pred_check_branch
      %719 = sbr.rel (0) target = $region45
    $region44: #{tpu_custom_call.1} parent=1 // pred_region
      %721 = dma.done [#allocation4], 256
    $region45: #{tpu_custom_call.1} parent=1 // pred_fallthru
      _
    %722 = vsyncpa [#allocation3], 1
    %723 = vsyncpa [#allocation6], 1
    %724 = vsyncpa [#allocation9], 1
    %725 = vsyncpa [#allocation4], 1

</llo_original>
